<compile_context>
chip_gen: v7x
topology: tpu7x:2x2x1
jax: 0.10.0
libtpu: 0.0.40
codegen_flags: <defaults>
</compile_context>

<pallas_src>
import functools

import jax
import jax.numpy as jnp
from jax.experimental import pallas as pl
from jax.experimental.pallas import tpu as pltpu


def _round_up(x, m):
    return (x + m - 1) // m * m


# ----------------------- Fused kernel: MLP + protos + cdist -----------------------

def _proto_net_kernel(feats_ref, onehot_t_ref, w1_ref, b1_ref, w2_ref, b2_ref,
                      dist_ref):
    # ---- 2-layer MLP over the concatenated [support; query] rows (one dot/layer) ----
    h = jnp.maximum(
        jnp.dot(feats_ref[...], w1_ref[...], preferred_element_type=jnp.float32)
        + b1_ref[...], 0.0)                                                # (Ntot, Hp)
    emb = (jnp.dot(h, w2_ref[...], preferred_element_type=jnp.float32)
           + b2_ref[...])                                                  # (Ntot, Dp)

    ns_pad = onehot_t_ref.shape[1]
    s_emb = emb[:ns_pad, :]            # (Nsp, Dp) static, sublane-aligned slice
    q_emb = emb[ns_pad:, :]            # (Mp,  Dp)

    # ---- prototypes: per-class mean via one-hot matmul, natural layouts ----
    onehot_t = onehot_t_ref[...]                                           # (Cp, Nsp)
    counts = jnp.sum(onehot_t, axis=1, keepdims=True)                      # (Cp, 1)
    proto_sum = jnp.dot(onehot_t, s_emb,
                        preferred_element_type=jnp.float32)                # (Cp, Dp)
    # Exact mean; empty class -> 1/0 = inf -> NaN, matching torch.mean of empty slice.
    protos = proto_sum * (1.0 / counts)                                    # (Cp, Dp)

    # Only the tiny (Cp, Dp) prototype tile is transposed (XLU, free slot), so the
    # cross matmul and p_sq reduction run on lane-dense, untransposed operands.
    protos_t = protos.T                                                    # (Dp, Cp)

    # ---- torch.cdist (p=2): sqrt(|q|^2 + |p|^2 - 2 q.p), clamped at 0 ----
    q_sq = jnp.sum(q_emb * q_emb, axis=1, keepdims=True)                   # (Mp, 1)
    p_sq = jnp.sum(protos_t * protos_t, axis=0, keepdims=True)             # (1, Cp)
    cross = jnp.dot(q_emb, protos_t, preferred_element_type=jnp.float32)   # (Mp, Cp)
    d2 = jnp.maximum(q_sq + p_sq - 2.0 * cross, 0.0)
    dist_ref[...] = jnp.sqrt(d2)                                           # (Mp, Cp)


def proto_net_distances(feats, onehot_t, w1_t, b1, w2_t, b2, m_pad):
    ntot, f_pad = feats.shape
    c_pad, ns_pad = onehot_t.shape
    h_pad = w1_t.shape[1]
    d_pad = w2_t.shape[1]

    def full(shape):
        return pl.BlockSpec(shape, lambda i, _n=len(shape): (0,) * _n)

    return pl.pallas_call(
        _proto_net_kernel,
        grid=(1,),
        in_specs=[
            full((ntot, f_pad)),    # [support; query] features, padded
            full((c_pad, ns_pad)),  # one-hot^T
            full((f_pad, h_pad)),   # w1 (pre-transposed, padded)
            full((1, h_pad)),       # b1
            full((h_pad, d_pad)),   # w2 (pre-transposed, padded)
            full((1, d_pad)),       # b2
        ],
        out_specs=full((m_pad, c_pad)),
        out_shape=jax.ShapeDtypeStruct((m_pad, c_pad), jnp.float32),
        compiler_params=pltpu.CompilerParams(dimension_semantics=("arbitrary",)),
    )(feats, onehot_t, w1_t, b1, w2_t, b2)


def _forward_impl(support_set, query_set, w1_t, b1, w2_t, b2, *,
                  in_features, num_classes):
    ns = support_set.shape[0]
    m = query_set.shape[0]
    f_pad = w1_t.shape[0]
    ns_pad = _round_up(ns, 8)
    m_pad = _round_up(m, 8)
    c_pad = _round_up(num_classes, 128)

    # Labels bypass the feature extractor entirely.
    s_feats = support_set[:, :in_features]
    labels = support_set[:, in_features].astype(jnp.int32)

    # Row-pad to multiples of 8 and lane-pad features, then stack so the MLP runs
    # once over all rows inside the kernel.
    s_block = jnp.pad(s_feats, ((0, ns_pad - ns), (0, f_pad - in_features)))
    q_block = jnp.pad(query_set, ((0, m_pad - m), (0, f_pad - in_features)))
    feats = jnp.concatenate([s_block, q_block], axis=0)

    # One-hot^T built outside the kernel. Padded support rows get label -1 (match
    # nothing); padded class rows never match real labels, so their prototype rows
    # are garbage and are discarded by the final slice.
    labels_p = jnp.pad(labels, (0, ns_pad - ns), constant_values=-1)
    onehot_t = (jnp.arange(c_pad, dtype=jnp.int32)[:, None]
                == labels_p[None, :]).astype(jnp.float32)

    dist = proto_net_distances(feats, onehot_t, w1_t, b1, w2_t, b2, m_pad)
    return dist[:m, :num_classes]


# ---------------------------------- Module glue ----------------------------------

class PrototypicalNetworkPallas:
    def __init__(self, in_features, hidden_dim, num_classes, embedding_dim=64):
        self.in_features = in_features
        self.hidden_dim = hidden_dim
        self.num_classes = num_classes
        self.embedding_dim = embedding_dim

        key = jax.random.PRNGKey(42)
        k1, k2, k3, k4 = jax.random.split(key, 4)
        # Reference (unpadded) weights, stored pre-transposed ((in, out)).
        self.w1_t = (jax.random.normal(k1, (in_features, hidden_dim)) * 0.1).astype(jnp.float32)
        self.b1 = (jax.random.normal(k2, (1, hidden_dim)) * 0.1).astype(jnp.float32)
        self.w2_t = (jax.random.normal(k3, (hidden_dim, embedding_dim)) * 0.1).astype(jnp.float32)
        self.b2 = (jax.random.normal(k4, (1, embedding_dim)) * 0.1).astype(jnp.float32)

        # Lane-padded copies fed to the kernel. Zero padding keeps the math exact:
        # padded hidden/embedding columns stay identically zero through ReLU/bias.
        f_pad = _round_up(in_features, 128)
        h_pad = _round_up(hidden_dim, 128)
        d_pad = _round_up(embedding_dim, 128)
        self.w1_t_pad = jnp.pad(self.w1_t, ((0, f_pad - in_features), (0, h_pad - hidden_dim)))
        self.b1_pad = jnp.pad(self.b1, ((0, 0), (0, h_pad - hidden_dim)))
        self.w2_t_pad = jnp.pad(self.w2_t, ((0, h_pad - hidden_dim), (0, d_pad - embedding_dim)))
        self.b2_pad = jnp.pad(self.b2, ((0, 0), (0, d_pad - embedding_dim)))

        self._fwd = jax.jit(functools.partial(
            _forward_impl, in_features=in_features, num_classes=num_classes))

    def forward(self, support_set, query_set):
        return self._fwd(support_set, query_set,
                         self.w1_t_pad, self.b1_pad, self.w2_t_pad, self.b2_pad)


# ------------------------------------ Reference -----------------------------------

def _reference(net, support_set, query_set):
    f_in = net.in_features

    def extract(x):
        h = jnp.maximum(x @ net.w1_t + net.b1, 0.0)
        return h @ net.w2_t + net.b2

    s_emb = extract(support_set[:, :f_in])
    q_emb = extract(query_set)
    labels = support_set[:, f_in]
    protos = []
    for c in range(net.num_classes):
        protos.append(s_emb[labels == c].mean(axis=0))
    protos = jnp.stack(protos)
    diff = q_emb[:, None, :] - protos[None, :, :]
    return jnp.sqrt(jnp.sum(diff * diff, axis=-1))


if __name__ == "__main__":
    F_IN, HIDDEN, EMB, C = 16, 32, 64, 3
    NS, M = 12, 8  # 4 support samples per class, 8 queries

    key = jax.random.PRNGKey(0)
    ks, kq = jax.random.split(key)
    support_feats = jax.random.normal(ks, (NS, F_IN), dtype=jnp.float32)
    support_labels = jnp.repeat(jnp.arange(C), NS // C).astype(jnp.float32)
    support_set = jnp.concatenate([support_feats, support_labels[:, None]], axis=1)  # (12, 17)
    query_set = jax.random.normal(kq, (M, F_IN), dtype=jnp.float32)                   # (8, 16)

    net = PrototypicalNetworkPallas(F_IN, HIDDEN, C, embedding_dim=EMB)
    distances = net.forward(support_set, query_set)
    distances = jax.block_until_ready(distances)

    assert distances.shape == (M, C), distances.shape
    assert bool(jnp.all(jnp.isfinite(distances)))

    ref = _reference(net, support_set, query_set)
    assert bool(jnp.allclose(distances, ref, atol=1e-3, rtol=1e-3)), (
        f"max abs err {float(jnp.max(jnp.abs(distances - ref)))}")

    print("KERNEL_OK")
</pallas_src>

<mosaic_0001>
module attributes {stable_mosaic.version = 11 : i64} {
  func.func @_proto_net_kernel(%arg0: i32, %arg1: memref<24x128xf32, #tpu.memory_space<vmem>>, %arg2: memref<128x16xf32, #tpu.memory_space<vmem>>, %arg3: memref<128x128xf32, #tpu.memory_space<vmem>>, %arg4: memref<1x128xf32, #tpu.memory_space<vmem>>, %arg5: memref<128x128xf32, #tpu.memory_space<vmem>>, %arg6: memref<1x128xf32, #tpu.memory_space<vmem>>, %arg7: memref<8x128xf32, #tpu.memory_space<vmem>>) attributes {dimension_semantics = [#tpu.dimension_semantics<arbitrary>], iteration_bounds = array<i64: 1>, scalar_prefetch = 0 : i64, scratch_operands = 0 : i64, tpu.core_type = #tpu.core_type<tc>, window_params = [{pipeline_mode = #tpu.pipeline_mode<synchronous>, transform_indices = @transform_0, window_bounds = array<i64: 24, 128>}, {pipeline_mode = #tpu.pipeline_mode<synchronous>, transform_indices = @transform_1, window_bounds = array<i64: 128, 16>}, {pipeline_mode = #tpu.pipeline_mode<synchronous>, transform_indices = @transform_2, window_bounds = array<i64: 128, 128>}, {pipeline_mode = #tpu.pipeline_mode<synchronous>, transform_indices = @transform_3, window_bounds = array<i64: 1, 128>}, {pipeline_mode = #tpu.pipeline_mode<synchronous>, transform_indices = @transform_4, window_bounds = array<i64: 128, 128>}, {pipeline_mode = #tpu.pipeline_mode<synchronous>, transform_indices = @transform_5, window_bounds = array<i64: 1, 128>}, {pipeline_mode = #tpu.pipeline_mode<synchronous>, transform_indices = @transform_6, window_bounds = array<i64: 8, 128>}]} {
    %c0 = arith.constant 0 : index
    %c0_0 = arith.constant 0 : index
    %0 = vector.load %arg1[%c0, %c0_0] : memref<24x128xf32, #tpu.memory_space<vmem>>, vector<24x128xf32>
    %c0_1 = arith.constant 0 : index
    %c0_2 = arith.constant 0 : index
    %1 = vector.load %arg3[%c0_1, %c0_2] : memref<128x128xf32, #tpu.memory_space<vmem>>, vector<128x128xf32>
    %cst = arith.constant dense<0.000000e+00> : vector<24x128xf32>
    %2 = tpu.matmul %0, %1, %cst {dimension_numbers = #tpu.dot_dimension_numbers<[1], [0], [0], [1], [0, 0, 1, 1], [], []>} : vector<24x128xf32>, vector<128x128xf32>, vector<24x128xf32> -> vector<24x128xf32>
    %c0_3 = arith.constant 0 : index
    %c0_4 = arith.constant 0 : index
    %3 = vector.load %arg4[%c0_3, %c0_4] : memref<1x128xf32, #tpu.memory_space<vmem>>, vector<1x128xf32>
    %4 = vector.broadcast %3 : vector<1x128xf32> to vector<24x128xf32>
    %5 = arith.addf %2, %4 : vector<24x128xf32>
    %cst_5 = arith.constant 0.000000e+00 : f32
    %6 = vector.broadcast %cst_5 : f32 to vector<24x128xf32>
    %7 = arith.maximumf %5, %6 : vector<24x128xf32>
    %c0_6 = arith.constant 0 : index
    %c0_7 = arith.constant 0 : index
    %8 = vector.load %arg5[%c0_6, %c0_7] : memref<128x128xf32, #tpu.memory_space<vmem>>, vector<128x128xf32>
    %cst_8 = arith.constant dense<0.000000e+00> : vector<24x128xf32>
    %9 = tpu.matmul %7, %8, %cst_8 {dimension_numbers = #tpu.dot_dimension_numbers<[1], [0], [0], [1], [0, 0, 1, 1], [], []>} : vector<24x128xf32>, vector<128x128xf32>, vector<24x128xf32> -> vector<24x128xf32>
    %c0_9 = arith.constant 0 : index
    %c0_10 = arith.constant 0 : index
    %10 = vector.load %arg6[%c0_9, %c0_10] : memref<1x128xf32, #tpu.memory_space<vmem>>, vector<1x128xf32>
    %11 = vector.broadcast %10 : vector<1x128xf32> to vector<24x128xf32>
    %12 = arith.addf %9, %11 : vector<24x128xf32>
    %13 = vector.extract_strided_slice %12 {offsets = [0, 0], sizes = [16, 128], strides = [1, 1]} : vector<24x128xf32> to vector<16x128xf32>
    %14 = vector.extract_strided_slice %12 {offsets = [16, 0], sizes = [8, 128], strides = [1, 1]} : vector<24x128xf32> to vector<8x128xf32>
    %c0_11 = arith.constant 0 : index
    %c0_12 = arith.constant 0 : index
    %15 = vector.load %arg2[%c0_11, %c0_12] : memref<128x16xf32, #tpu.memory_space<vmem>>, vector<128x16xf32>
    %cst_13 = arith.constant dense<0.000000e+00> : vector<128xf32>
    %16 = vector.multi_reduction <add>, %15, %cst_13 [1] : vector<128x16xf32> to vector<128xf32>
    %17 = vector.shape_cast %16 : vector<128xf32> to vector<128x1xf32>
    %cst_14 = arith.constant dense<0.000000e+00> : vector<128x128xf32>
    %18 = tpu.matmul %15, %13, %cst_14 {dimension_numbers = #tpu.dot_dimension_numbers<[1], [0], [0], [1], [0, 0, 1, 1], [], []>} : vector<128x16xf32>, vector<16x128xf32>, vector<128x128xf32> -> vector<128x128xf32>
    %cst_15 = arith.constant 1.000000e+00 : f32
    %19 = vector.broadcast %cst_15 : f32 to vector<128x1xf32>
    %20 = arith.divf %19, %17 : vector<128x1xf32>
    %21 = vector.broadcast %20 : vector<128x1xf32> to vector<128x128xf32>
    %22 = arith.mulf %18, %21 : vector<128x128xf32>
    %23 = tpu.transpose %22, [1, 0] : vector<128x128xf32> -> vector<128x128xf32>
    %24 = arith.mulf %14, %14 : vector<8x128xf32>
    %cst_16 = arith.constant dense<0.000000e+00> : vector<8xf32>
    %25 = vector.multi_reduction <add>, %24, %cst_16 [1] : vector<8x128xf32> to vector<8xf32>
    %26 = vector.shape_cast %25 : vector<8xf32> to vector<8x1xf32>
    %27 = arith.mulf %23, %23 : vector<128x128xf32>
    %cst_17 = arith.constant dense<0.000000e+00> : vector<128xf32>
    %28 = vector.multi_reduction <add>, %27, %cst_17 [0] : vector<128x128xf32> to vector<128xf32>
    %29 = vector.shape_cast %28 : vector<128xf32> to vector<1x128xf32>
    %cst_18 = arith.constant dense<0.000000e+00> : vector<8x128xf32>
    %30 = tpu.matmul %14, %23, %cst_18 {dimension_numbers = #tpu.dot_dimension_numbers<[1], [0], [0], [1], [0, 0, 1, 1], [], []>} : vector<8x128xf32>, vector<128x128xf32>, vector<8x128xf32> -> vector<8x128xf32>
    %31 = vector.broadcast %26 : vector<8x1xf32> to vector<8x128xf32>
    %32 = vector.broadcast %29 : vector<1x128xf32> to vector<8x128xf32>
    %33 = arith.addf %31, %32 : vector<8x128xf32>
    %cst_19 = arith.constant 2.000000e+00 : f32
    %34 = vector.broadcast %cst_19 : f32 to vector<8x128xf32>
    %35 = arith.mulf %34, %30 : vector<8x128xf32>
    %36 = arith.subf %33, %35 : vector<8x128xf32>
    %cst_20 = arith.constant 0.000000e+00 : f32
    %37 = vector.broadcast %cst_20 : f32 to vector<8x128xf32>
    %38 = arith.maximumf %36, %37 : vector<8x128xf32>
    %39 = math.sqrt %38 : vector<8x128xf32>
    %c0_21 = arith.constant 0 : index
    %c0_22 = arith.constant 0 : index
    %40 = vector.load %arg7[%c0_21, %c0_22] : memref<8x128xf32, #tpu.memory_space<vmem>>, vector<8x128xf32>
    tpu.vector_store %arg7[%c0_21, %c0_22], %39 {strides = array<i32>} : memref<8x128xf32, #tpu.memory_space<vmem>>, vector<8x128xf32>,
    return
  }
  func.func @transform_0(%arg0: i32) -> (i32, i32) {
    %c0_i32 = arith.constant 0 : i32
    %c0_i32_0 = arith.constant 0 : i32
    %c0_i32_1 = arith.constant 0 : i32
    return %c0_i32, %c0_i32_0 : i32, i32
  }
  func.func @transform_1(%arg0: i32) -> (i32, i32) {
    %c0_i32 = arith.constant 0 : i32
    %c0_i32_0 = arith.constant 0 : i32
    %c0_i32_1 = arith.constant 0 : i32
    return %c0_i32, %c0_i32_0 : i32, i32
  }
  func.func @transform_2(%arg0: i32) -> (i32, i32) {
    %c0_i32 = arith.constant 0 : i32
    %c0_i32_0 = arith.constant 0 : i32
    %c0_i32_1 = arith.constant 0 : i32
    return %c0_i32, %c0_i32_0 : i32, i32
  }
  func.func @transform_3(%arg0: i32) -> (i32, i32) {
    %c0_i32 = arith.constant 0 : i32
    %c0_i32_0 = arith.constant 0 : i32
    %c0_i32_1 = arith.constant 0 : i32
    return %c0_i32, %c0_i32_0 : i32, i32
  }
  func.func @transform_4(%arg0: i32) -> (i32, i32) {
    %c0_i32 = arith.constant 0 : i32
    %c0_i32_0 = arith.constant 0 : i32
    %c0_i32_1 = arith.constant 0 : i32
    return %c0_i32, %c0_i32_0 : i32, i32
  }
  func.func @transform_5(%arg0: i32) -> (i32, i32) {
    %c0_i32 = arith.constant 0 : i32
    %c0_i32_0 = arith.constant 0 : i32
    %c0_i32_1 = arith.constant 0 : i32
    return %c0_i32, %c0_i32_0 : i32, i32
  }
  func.func @transform_6(%arg0: i32) -> (i32, i32) {
    %c0_i32 = arith.constant 0 : i32
    %c0_i32_0 = arith.constant 0 : i32
    %c0_i32_1 = arith.constant 0 : i32
    return %c0_i32, %c0_i32_0 : i32, i32
  }
}

</mosaic_0001>

<llo_original>
// kernel: _forward_impl.1
$region0: #{_forward_impl.1}
  #allocation0 [shape = 'u32[]', space=smem, size = 0x4, offset = 0x4, fixed_abs, tag = 'smem constant byte address 0x4 - core index']
  #allocation1 [shape = 'u32[144,128]{1,0:T(1,128)}', space=vmem, size = 0x12000, scoped, tag = 'internal scratch']
  %s0 = inlined_call_operand.vmem [shape: f32[24,128], index: 0, kind: input, shape index: {}]
  %s1 = inlined_call_operand.vmem [shape: f32[128,16], index: 1, kind: input, shape index: {}]
  %s2 = inlined_call_operand.vmem [shape: f32[128,128], index: 2, kind: input, shape index: {}]
  %s3 = inlined_call_operand.vmem [shape: f32[1,128], index: 3, kind: input, shape index: {}]
  %s4 = inlined_call_operand.hbm [shape: f32[128,128], index: 4, kind: input, shape index: {}]
  %s5 = inlined_call_operand.vmem [shape: f32[1,128], index: 5, kind: input, shape index: {}]
  %s6 = inlined_call_operand.vmem [shape: f32[8,128], index: 6, kind: output, shape index: {}]
  %s7 = sld [smem:[#allocation0]]
  $region38: #{_forward_impl.1} parent=0
    _
  %s9 = ssub.s32 1, %s7
  %s10 = scalar_select 0, %s9, %s7
  $region1: #{_forward_impl.1} parent=0
    #allocation2 [shape = 'u8[65536]{0}', space=vmem, size = 0x10000, scoped, tag = 'input window, operand 4, single buffered']
    #allocation3 [shape = 's32[1]{0}', space=sflag, size = 0x4, scoped, tag = 'scoped memory for _forward_impl.1']
    %11 = vsyncpa [#allocation3], 0
    // Predicated region
    $region2: #{_forward_impl.1} parent=1 // pred_check
      _
    $region3: #{_forward_impl.1} parent=1 // pred_check_branch
      %13 = sbr.rel (0) target = $region5
    $region4: #{_forward_impl.1} parent=1 // pred_region
      _
    $region5: #{_forward_impl.1} parent=1 // pred_fallthru
      _
    // Predicated region
    $region6: #{_forward_impl.1} parent=1 // pred_check
      _
    $region7: #{_forward_impl.1} parent=1 // pred_check_branch
      %15 = sbr.rel (0) target = $region9
    $region8: #{_forward_impl.1} parent=1 // pred_region
      _
    $region9: #{_forward_impl.1} parent=1 // pred_fallthru
      _
    // Predicated region
    $region10: #{_forward_impl.1} parent=1 // pred_check
      _
    $region11: #{_forward_impl.1} parent=1 // pred_check_branch
      %17 = sbr.rel (0) target = $region13
    $region12: #{_forward_impl.1} parent=1 // pred_region
      _
    $region13: #{_forward_impl.1} parent=1 // pred_fallthru
      _
    // Predicated region
    $region14: #{_forward_impl.1} parent=1 // pred_check
      _
    $region15: #{_forward_impl.1} parent=1 // pred_check_branch
      %19 = sbr.rel (0) target = $region17
    $region16: #{_forward_impl.1} parent=1 // pred_region
      _
    $region17: #{_forward_impl.1} parent=1 // pred_fallthru
      _
    // Predicated region
    $region18: #{_forward_impl.1} parent=1 // pred_check
      _
    $region19: #{_forward_impl.1} parent=1 // pred_check_branch
      %21 = sbr.rel (0) target = $region21
    $region20: #{_forward_impl.1} parent=1 // pred_region
      %s23 = ssub.s32 2048, 2048
      %24 = vsyncadd [#allocation3], %s23
      %s25 = sshll.u32 [#allocation2], 4
      %s26 = int_to_ptr.vmem [resolvable:$true] %s25
      %31 = dma.hbm_to_vmem [thread:$0]  %s4, 2048, %s26, [#allocation3], 128, 128, 8
    $region21: #{_forward_impl.1} parent=1 // pred_fallthru
      _
    // Predicated region
    $region22: #{_forward_impl.1} parent=1 // pred_check
      _
    $region23: #{_forward_impl.1} parent=1 // pred_check_branch
      %33 = sbr.rel (0) target = $region25
    $region24: #{_forward_impl.1} parent=1 // pred_region
      _
    $region25: #{_forward_impl.1} parent=1 // pred_fallthru
      _
    // Predicated region
    $region26: #{_forward_impl.1} parent=1 // pred_check
      _
    $region27: #{_forward_impl.1} parent=1 // pred_check_branch
      %35 = sbr.rel (0) target = $region29
    $region28: #{_forward_impl.1} parent=1 // pred_region
      %36 = dma.done [#allocation3], 2048
    $region29: #{_forward_impl.1} parent=1 // pred_fallthru
      _
    %v37 = vld [vmem:[%s0] sm:$0xff]
    %v38 = vld [vmem:[%s0 + $0x8] sm:$0xff]
    %v39 = vld [vmem:[%s0 + $0x10] sm:$0xff]
    %v40 = vld [vmem:[%s2] sm:$0xff]
    %v41 = vld [vmem:[%s2 + $0x8] sm:$0xff]
    %v42 = vld [vmem:[%s2 + $0x10] sm:$0xff]
    %v43 = vld [vmem:[%s2 + $0x18] sm:$0xff]
    %v44 = vld [vmem:[%s2 + $0x20] sm:$0xff]
    %v45 = vld [vmem:[%s2 + $0x28] sm:$0xff]
    %v46 = vld [vmem:[%s2 + $0x30] sm:$0xff]
    %v47 = vld [vmem:[%s2 + $0x38] sm:$0xff]
    %v48 = vld [vmem:[%s2 + $0x40] sm:$0xff]
    %v49 = vld [vmem:[%s2 + $0x48] sm:$0xff]
    %v50 = vld [vmem:[%s2 + $0x50] sm:$0xff]
    %v51 = vld [vmem:[%s2 + $0x58] sm:$0xff]
    %v52 = vld [vmem:[%s2 + $0x60] sm:$0xff]
    %v53 = vld [vmem:[%s2 + $0x68] sm:$0xff]
    %v54 = vld [vmem:[%s2 + $0x70] sm:$0xff]
    %v55 = vld [vmem:[%s2 + $0x78] sm:$0xff]
    %v56 = vld [vmem:[%s3] sm:$0x1]
    %v58 = vlaneseq
    %v59 = vshrl.u32 %v58, 7
    %v60 = vsub.s32 0, %v59
    %v61 = vrot.slane %v56, %v60
    %63 = vmatprep.subr.mxu0 0.0
    %64 = vmatpush1.msra.mxu0 %v40
    %65 = vmatprep.subr.mxu0 0.0
    %66 = vmatpush1.msra.mxu0 %v41
    %67 = vmatprep.subr.mxu0 0.0
    %68 = vmatpush1.msra.mxu0 %v42
    %69 = vmatprep.subr.mxu0 0.0
    %70 = vmatpush1.msra.mxu0 %v43
    %71 = vmatprep.subr.mxu0 0.0
    %72 = vmatpush1.msra.mxu0 %v44
    %73 = vmatprep.subr.mxu0 0.0
    %74 = vmatpush1.msra.mxu0 %v45
    %75 = vmatprep.subr.mxu0 0.0
    %76 = vmatpush1.msra.mxu0 %v46
    %77 = vmatprep.subr.mxu0 0.0
    %78 = vmatpush1.msra.mxu0 %v47
    %79 = vmatprep.subr.mxu0 0.0
    %80 = vmatpush1.msra.mxu0 %v48
    %81 = vmatprep.subr.mxu0 0.0
    %82 = vmatpush1.msra.mxu0 %v49
    %83 = vmatprep.subr.mxu0 0.0
    %84 = vmatpush1.msra.mxu0 %v50
    %85 = vmatprep.subr.mxu0 0.0
    %86 = vmatpush1.msra.mxu0 %v51
    %87 = vmatprep.subr.mxu0 0.0
    %88 = vmatpush1.msra.mxu0 %v52
    %89 = vmatprep.subr.mxu0 0.0
    %90 = vmatpush1.msra.mxu0 %v53
    %91 = vmatprep.subr.mxu0 0.0
    %92 = vmatpush1.msra.mxu0 %v54
    %93 = vmatprep.subr.mxu0 0.0
    %94 = vmatpush1.msra.mxu0 %v55
    %95 = vmatprep.subr.mxu0 0.0
    %96 = vmatpush1.msra.mxu0 0.0
    %97 = vmatprep.subr.mxu0 0.0
    %98 = vmatpush1.msra.mxu0 0.0
    %99 = vmatprep.subr.mxu0 0.0
    %100 = vmatpush1.msra.mxu0 0.0
    %101 = vmatprep.subr.mxu0 0.0
    %102 = vmatpush1.msra.mxu0 0.0
    %103 = vmatprep.subr.mxu0 0.0
    %104 = vmatpush1.msra.mxu0 0.0
    %105 = vmatprep.subr.mxu0 0.0
    %106 = vmatpush1.msra.mxu0 0.0
    %107 = vmatprep.subr.mxu0 0.0
    %108 = vmatpush1.msra.mxu0 0.0
    %109 = vmatprep.subr.mxu0 0.0
    %110 = vmatpush1.msra.mxu0 0.0
    %111 = vmatprep.subr.mxu0 0.0
    %112 = vmatpush1.msra.mxu0 0.0
    %113 = vmatprep.subr.mxu0 0.0
    %114 = vmatpush1.msra.mxu0 0.0
    %115 = vmatprep.subr.mxu0 0.0
    %116 = vmatpush1.msra.mxu0 0.0
    %117 = vmatprep.subr.mxu0 0.0
    %118 = vmatpush1.msra.mxu0 0.0
    %119 = vmatprep.subr.mxu0 0.0
    %120 = vmatpush1.msra.mxu0 0.0
    %121 = vmatprep.subr.mxu0 0.0
    %122 = vmatpush1.msra.mxu0 0.0
    %123 = vmatprep.subr.mxu0 0.0
    %124 = vmatpush1.msra.mxu0 0.0
    %125 = vmatprep.subr.mxu0 0.0
    %126 = vmatpush1.msra.mxu0 0.0
    %127 = vmatprep.mubr.f32.mxu0 0.0
    %128 = vmatmul.mubr.f32.gmra.mrb[0].mxu0 %v37
    %v129 = vpop.f32.mrb[0].mxu0
    %v130 = vadd.f32 %v61, %v129
    %v131 = vpop.f32.mrb[0].mxu0
    %132 = vmatprep.mubr.f32.mxu0 0.0
    %133 = vmatmul.mubr.f32.gmra.mrb[0].mxu0 %v38
    %v134 = vpop.f32.mrb[0].mxu0
    %v135 = vadd.f32 %v61, %v134
    %v136 = vpop.f32.mrb[0].mxu0
    %137 = vmatprep.mubr.f32.mxu0 0.0
    %138 = vmatmul.mubr.f32.gmra.mrb[0].mxu0 %v39
    %v139 = vpop.f32.mrb[0].mxu0
    %v140 = vadd.f32 %v61, %v139
    %v141 = vpop.f32.mrb[0].mxu0
    %142 = vdwg.mxu0
    %v143 = vmax.f32 %v130, 0.0
    %v144 = vmax.f32 %v135, 0.0
    %v145 = vmax.f32 %v140, 0.0
    %v146 = vld [vmem:[#allocation2] sm:$0xff]
    %v147 = vld [vmem:[#allocation2 + $0x8] sm:$0xff]
    %v148 = vld [vmem:[#allocation2 + $0x10] sm:$0xff]
    %v149 = vld [vmem:[#allocation2 + $0x18] sm:$0xff]
    %v150 = vld [vmem:[#allocation2 + $0x20] sm:$0xff]
    %v151 = vld [vmem:[#allocation2 + $0x28] sm:$0xff]
    %v152 = vld [vmem:[#allocation2 + $0x30] sm:$0xff]
    %v153 = vld [vmem:[#allocation2 + $0x38] sm:$0xff]
    %v154 = vld [vmem:[#allocation2 + $0x40] sm:$0xff]
    %v155 = vld [vmem:[#allocation2 + $0x48] sm:$0xff]
    %v156 = vld [vmem:[#allocation2 + $0x50] sm:$0xff]
    %v157 = vld [vmem:[#allocation2 + $0x58] sm:$0xff]
    %v158 = vld [vmem:[#allocation2 + $0x60] sm:$0xff]
    %v159 = vld [vmem:[#allocation2 + $0x68] sm:$0xff]
    %v160 = vld [vmem:[#allocation2 + $0x70] sm:$0xff]
    %v161 = vld [vmem:[#allocation2 + $0x78] sm:$0xff]
    %v162 = vld [vmem:[%s5] sm:$0x1]
    %v164 = vlaneseq
    %v165 = vshrl.u32 %v164, 7
    %v166 = vsub.s32 0, %v165
    %v167 = vrot.slane %v162, %v166
    %169 = vmatprep.subr.mxu0 0.0
    %170 = vmatpush1.msra.mxu0 %v146
    %171 = vmatprep.subr.mxu0 0.0
    %172 = vmatpush1.msra.mxu0 %v147
    %173 = vmatprep.subr.mxu0 0.0
    %174 = vmatpush1.msra.mxu0 %v148
    %175 = vmatprep.subr.mxu0 0.0
    %176 = vmatpush1.msra.mxu0 %v149
    %177 = vmatprep.subr.mxu0 0.0
    %178 = vmatpush1.msra.mxu0 %v150
    %179 = vmatprep.subr.mxu0 0.0
    %180 = vmatpush1.msra.mxu0 %v151
    %181 = vmatprep.subr.mxu0 0.0
    %182 = vmatpush1.msra.mxu0 %v152
    %183 = vmatprep.subr.mxu0 0.0
    %184 = vmatpush1.msra.mxu0 %v153
    %185 = vmatprep.subr.mxu0 0.0
    %186 = vmatpush1.msra.mxu0 %v154
    %187 = vmatprep.subr.mxu0 0.0
    %188 = vmatpush1.msra.mxu0 %v155
    %189 = vmatprep.subr.mxu0 0.0
    %190 = vmatpush1.msra.mxu0 %v156
    %191 = vmatprep.subr.mxu0 0.0
    %192 = vmatpush1.msra.mxu0 %v157
    %193 = vmatprep.subr.mxu0 0.0
    %194 = vmatpush1.msra.mxu0 %v158
    %195 = vmatprep.subr.mxu0 0.0
    %196 = vmatpush1.msra.mxu0 %v159
    %197 = vmatprep.subr.mxu0 0.0
    %198 = vmatpush1.msra.mxu0 %v160
    %199 = vmatprep.subr.mxu0 0.0
    %200 = vmatpush1.msra.mxu0 %v161
    %201 = vmatprep.subr.mxu0 0.0
    %202 = vmatpush1.msra.mxu0 0.0
    %203 = vmatprep.subr.mxu0 0.0
    %204 = vmatpush1.msra.mxu0 0.0
    %205 = vmatprep.subr.mxu0 0.0
    %206 = vmatpush1.msra.mxu0 0.0
    %207 = vmatprep.subr.mxu0 0.0
    %208 = vmatpush1.msra.mxu0 0.0
    %209 = vmatprep.subr.mxu0 0.0
    %210 = vmatpush1.msra.mxu0 0.0
    %211 = vmatprep.subr.mxu0 0.0
    %212 = vmatpush1.msra.mxu0 0.0
    %213 = vmatprep.subr.mxu0 0.0
    %214 = vmatpush1.msra.mxu0 0.0
    %215 = vmatprep.subr.mxu0 0.0
    %216 = vmatpush1.msra.mxu0 0.0
    %217 = vmatprep.subr.mxu0 0.0
    %218 = vmatpush1.msra.mxu0 0.0
    %219 = vmatprep.subr.mxu0 0.0
    %220 = vmatpush1.msra.mxu0 0.0
    %221 = vmatprep.subr.mxu0 0.0
    %222 = vmatpush1.msra.mxu0 0.0
    %223 = vmatprep.subr.mxu0 0.0
    %224 = vmatpush1.msra.mxu0 0.0
    %225 = vmatprep.subr.mxu0 0.0
    %226 = vmatpush1.msra.mxu0 0.0
    %227 = vmatprep.subr.mxu0 0.0
    %228 = vmatpush1.msra.mxu0 0.0
    %229 = vmatprep.subr.mxu0 0.0
    %230 = vmatpush1.msra.mxu0 0.0
    %231 = vmatprep.subr.mxu0 0.0
    %232 = vmatpush1.msra.mxu0 0.0
    %233 = vmatprep.mubr.f32.mxu0 0.0
    %234 = vmatmul.mubr.f32.gmra.mrb[0].mxu0 %v143
    %v235 = vpop.f32.mrb[0].mxu0
    %v236 = vadd.f32 %v167, %v235
    %v237 = vpop.f32.mrb[0].mxu0
    %238 = vmatprep.mubr.f32.mxu0 0.0
    %239 = vmatmul.mubr.f32.gmra.mrb[0].mxu0 %v144
    %v240 = vpop.f32.mrb[0].mxu0
    %v241 = vadd.f32 %v167, %v240
    %v242 = vpop.f32.mrb[0].mxu0
    %243 = vmatprep.mubr.f32.mxu0 0.0
    %244 = vmatmul.mubr.f32.gmra.mrb[0].mxu0 %v145
    %v245 = vpop.f32.mrb[0].mxu0
    %v246 = vadd.f32 %v167, %v245
    %v247 = vpop.f32.mrb[0].mxu0
    %248 = vdwg.mxu0
    %v249 = vld [vmem:[%s1] sm:$0xff]
    %v250 = vld [vmem:[%s1 + $0x8] sm:$0xff]
    %v251 = vld [vmem:[%s1 + $0x10] sm:$0xff]
    %v252 = vld [vmem:[%s1 + $0x18] sm:$0xff]
    %v253 = vld [vmem:[%s1 + $0x20] sm:$0xff]
    %v254 = vld [vmem:[%s1 + $0x28] sm:$0xff]
    %v255 = vld [vmem:[%s1 + $0x30] sm:$0xff]
    %v256 = vld [vmem:[%s1 + $0x38] sm:$0xff]
    %v257 = vld [vmem:[%s1 + $0x40] sm:$0xff]
    %v258 = vld [vmem:[%s1 + $0x48] sm:$0xff]
    %v259 = vld [vmem:[%s1 + $0x50] sm:$0xff]
    %v260 = vld [vmem:[%s1 + $0x58] sm:$0xff]
    %v261 = vld [vmem:[%s1 + $0x60] sm:$0xff]
    %v262 = vld [vmem:[%s1 + $0x68] sm:$0xff]
    %v263 = vld [vmem:[%s1 + $0x70] sm:$0xff]
    %v264 = vld [vmem:[%s1 + $0x78] sm:$0xff]
    %vm265 = vcmask 130048
    %v266 = vsel %vm265, %v249, 0.0
    %267 = vadd.xlane.f32.xlu0 %v266
    %v268 = vpop.xlane.xlu0 %267
    %v269 = vsel %vm265, %v250, 0.0
    %270 = vadd.xlane.f32.xlu0 %v269
    %v271 = vpop.xlane.xlu0 %270
    %v272 = vsel %vm265, %v251, 0.0
    %273 = vadd.xlane.f32.xlu0 %v272
    %v274 = vpop.xlane.xlu0 %273
    %v275 = vsel %vm265, %v252, 0.0
    %276 = vadd.xlane.f32.xlu0 %v275
    %v277 = vpop.xlane.xlu0 %276
    %v278 = vsel %vm265, %v253, 0.0
    %279 = vadd.xlane.f32.xlu0 %v278
    %v280 = vpop.xlane.xlu0 %279
    %v281 = vsel %vm265, %v254, 0.0
    %282 = vadd.xlane.f32.xlu0 %v281
    %v283 = vpop.xlane.xlu0 %282
    %v284 = vsel %vm265, %v255, 0.0
    %285 = vadd.xlane.f32.xlu0 %v284
    %v286 = vpop.xlane.xlu0 %285
    %v287 = vsel %vm265, %v256, 0.0
    %288 = vadd.xlane.f32.xlu0 %v287
    %v289 = vpop.xlane.xlu0 %288
    %v290 = vsel %vm265, %v257, 0.0
    %291 = vadd.xlane.f32.xlu0 %v290
    %v292 = vpop.xlane.xlu0 %291
    %v293 = vsel %vm265, %v258, 0.0
    %294 = vadd.xlane.f32.xlu0 %v293
    %v295 = vpop.xlane.xlu0 %294
    %v296 = vsel %vm265, %v259, 0.0
    %297 = vadd.xlane.f32.xlu0 %v296
    %v298 = vpop.xlane.xlu0 %297
    %v299 = vsel %vm265, %v260, 0.0
    %300 = vadd.xlane.f32.xlu0 %v299
    %v301 = vpop.xlane.xlu0 %300
    %v302 = vsel %vm265, %v261, 0.0
    %303 = vadd.xlane.f32.xlu0 %v302
    %v304 = vpop.xlane.xlu0 %303
    %v305 = vsel %vm265, %v262, 0.0
    %306 = vadd.xlane.f32.xlu0 %v305
    %v307 = vpop.xlane.xlu0 %306
    %v308 = vsel %vm265, %v263, 0.0
    %309 = vadd.xlane.f32.xlu0 %v308
    %v310 = vpop.xlane.xlu0 %309
    %v311 = vsel %vm265, %v264, 0.0
    %312 = vadd.xlane.f32.xlu0 %v311
    %v313 = vpop.xlane.xlu0 %312
    %v315 = vsel %vm265, %v249, 0
    %v318 = vsel %vm265, %v250, 0
    %v321 = vsel %vm265, %v251, 0
    %v324 = vsel %vm265, %v252, 0
    %v327 = vsel %vm265, %v253, 0
    %v330 = vsel %vm265, %v254, 0
    %v333 = vsel %vm265, %v255, 0
    %v336 = vsel %vm265, %v256, 0
    %v339 = vsel %vm265, %v257, 0
    %v342 = vsel %vm265, %v258, 0
    %v345 = vsel %vm265, %v259, 0
    %v348 = vsel %vm265, %v260, 0
    %v351 = vsel %vm265, %v261, 0
    %v354 = vsel %vm265, %v262, 0
    %v357 = vsel %vm265, %v263, 0
    %v360 = vsel %vm265, %v264, 0
    %362 = vmatprep.subr.mxu0 0.0
    %363 = vmatpush1.msra.mxu0 %v236
    %364 = vmatprep.subr.mxu0 0.0
    %365 = vmatpush1.msra.mxu0 %v241
    %366 = vmatprep.subr.mxu0 0.0
    %367 = vmatpush1.msra.mxu0 0.0
    %368 = vmatprep.subr.mxu0 0.0
    %369 = vmatpush1.msra.mxu0 0.0
    %370 = vmatprep.subr.mxu0 0.0
    %371 = vmatpush1.msra.mxu0 0.0
    %372 = vmatprep.subr.mxu0 0.0
    %373 = vmatpush1.msra.mxu0 0.0
    %374 = vmatprep.subr.mxu0 0.0
    %375 = vmatpush1.msra.mxu0 0.0
    %376 = vmatprep.subr.mxu0 0.0
    %377 = vmatpush1.msra.mxu0 0.0
    %378 = vmatprep.subr.mxu0 0.0
    %379 = vmatpush1.msra.mxu0 0.0
    %380 = vmatprep.subr.mxu0 0.0
    %381 = vmatpush1.msra.mxu0 0.0
    %382 = vmatprep.subr.mxu0 0.0
    %383 = vmatpush1.msra.mxu0 0.0
    %384 = vmatprep.subr.mxu0 0.0
    %385 = vmatpush1.msra.mxu0 0.0
    %386 = vmatprep.subr.mxu0 0.0
    %387 = vmatpush1.msra.mxu0 0.0
    %388 = vmatprep.subr.mxu0 0.0
    %389 = vmatpush1.msra.mxu0 0.0
    %390 = vmatprep.subr.mxu0 0.0
    %391 = vmatpush1.msra.mxu0 0.0
    %392 = vmatprep.subr.mxu0 0.0
    %393 = vmatpush1.msra.mxu0 0.0
    %394 = vmatprep.subr.mxu0 0.0
    %395 = vmatpush1.msra.mxu0 0.0
    %396 = vmatprep.subr.mxu0 0.0
    %397 = vmatpush1.msra.mxu0 0.0
    %398 = vmatprep.subr.mxu0 0.0
    %399 = vmatpush1.msra.mxu0 0.0
    %400 = vmatprep.subr.mxu0 0.0
    %401 = vmatpush1.msra.mxu0 0.0
    %402 = vmatprep.subr.mxu0 0.0
    %403 = vmatpush1.msra.mxu0 0.0
    %404 = vmatprep.subr.mxu0 0.0
    %405 = vmatpush1.msra.mxu0 0.0
    %406 = vmatprep.subr.mxu0 0.0
    %407 = vmatpush1.msra.mxu0 0.0
    %408 = vmatprep.subr.mxu0 0.0
    %409 = vmatpush1.msra.mxu0 0.0
    %410 = vmatprep.subr.mxu0 0.0
    %411 = vmatpush1.msra.mxu0 0.0
    %412 = vmatprep.subr.mxu0 0.0
    %413 = vmatpush1.msra.mxu0 0.0
    %414 = vmatprep.subr.mxu0 0.0
    %415 = vmatpush1.msra.mxu0 0.0
    %416 = vmatprep.subr.mxu0 0.0
    %417 = vmatpush1.msra.mxu0 0.0
    %418 = vmatprep.subr.mxu0 0.0
    %419 = vmatpush1.msra.mxu0 0.0
    %420 = vmatprep.subr.mxu0 0.0
    %421 = vmatpush1.msra.mxu0 0.0
    %422 = vmatprep.subr.mxu0 0.0
    %423 = vmatpush1.msra.mxu0 0.0
    %424 = vmatprep.subr.mxu0 0.0
    %425 = vmatpush1.msra.mxu0 0.0
    %426 = vmatprep.mubr.f32.mxu0 0.0
    %427 = vmatmul.mubr.f32.gmra.mrb[0].mxu0 %v315
    %v428 = vpop.f32.mrb[0].mxu0
    %v429 = vadd.f32 0.0, %v428
    %v430 = vpop.f32.mrb[0].mxu0
    %431 = vmatprep.mubr.f32.mxu0 0.0
    %432 = vmatmul.mubr.f32.gmra.mrb[0].mxu0 %v318
    %v433 = vpop.f32.mrb[0].mxu0
    %v434 = vadd.f32 0.0, %v433
    %v435 = vpop.f32.mrb[0].mxu0
    %436 = vmatprep.mubr.f32.mxu0 0.0
    %437 = vmatmul.mubr.f32.gmra.mrb[0].mxu0 %v321
    %v438 = vpop.f32.mrb[0].mxu0
    %v439 = vadd.f32 0.0, %v438
    %v440 = vpop.f32.mrb[0].mxu0
    %441 = vmatprep.mubr.f32.mxu0 0.0
    %442 = vmatmul.mubr.f32.gmra.mrb[0].mxu0 %v324
    %v443 = vpop.f32.mrb[0].mxu0
    %v444 = vadd.f32 0.0, %v443
    %v445 = vpop.f32.mrb[0].mxu0
    %446 = vmatprep.mubr.f32.mxu0 0.0
    %447 = vmatmul.mubr.f32.gmra.mrb[0].mxu0 %v327
    %v448 = vpop.f32.mrb[0].mxu0
    %v449 = vadd.f32 0.0, %v448
    %v450 = vpop.f32.mrb[0].mxu0
    %451 = vmatprep.mubr.f32.mxu0 0.0
    %452 = vmatmul.mubr.f32.gmra.mrb[0].mxu0 %v330
    %v453 = vpop.f32.mrb[0].mxu0
    %v454 = vadd.f32 0.0, %v453
    %v455 = vpop.f32.mrb[0].mxu0
    %456 = vmatprep.mubr.f32.mxu0 0.0
    %457 = vmatmul.mubr.f32.gmra.mrb[0].mxu0 %v333
    %v458 = vpop.f32.mrb[0].mxu0
    %v459 = vadd.f32 0.0, %v458
    %v460 = vpop.f32.mrb[0].mxu0
    %461 = vmatprep.mubr.f32.mxu0 0.0
    %462 = vmatmul.mubr.f32.gmra.mrb[0].mxu0 %v336
    %v463 = vpop.f32.mrb[0].mxu0
    %v464 = vadd.f32 0.0, %v463
    %v465 = vpop.f32.mrb[0].mxu0
    %466 = vmatprep.mubr.f32.mxu0 0.0
    %467 = vmatmul.mubr.f32.gmra.mrb[0].mxu0 %v339
    %v468 = vpop.f32.mrb[0].mxu0
    %v469 = vadd.f32 0.0, %v468
    %v470 = vpop.f32.mrb[0].mxu0
    %471 = vmatprep.mubr.f32.mxu0 0.0
    %472 = vmatmul.mubr.f32.gmra.mrb[0].mxu0 %v342
    %v473 = vpop.f32.mrb[0].mxu0
    %v474 = vadd.f32 0.0, %v473
    %v475 = vpop.f32.mrb[0].mxu0
    %476 = vmatprep.mubr.f32.mxu0 0.0
    %477 = vmatmul.mubr.f32.gmra.mrb[0].mxu0 %v345
    %v478 = vpop.f32.mrb[0].mxu0
    %v479 = vadd.f32 0.0, %v478
    %v480 = vpop.f32.mrb[0].mxu0
    %481 = vmatprep.mubr.f32.mxu0 0.0
    %482 = vmatmul.mubr.f32.gmra.mrb[0].mxu0 %v348
    %v483 = vpop.f32.mrb[0].mxu0
    %v484 = vadd.f32 0.0, %v483
    %v485 = vpop.f32.mrb[0].mxu0
    %486 = vmatprep.mubr.f32.mxu0 0.0
    %487 = vmatmul.mubr.f32.gmra.mrb[0].mxu0 %v351
    %v488 = vpop.f32.mrb[0].mxu0
    %v489 = vadd.f32 0.0, %v488
    %v490 = vpop.f32.mrb[0].mxu0
    %491 = vmatprep.mubr.f32.mxu0 0.0
    %492 = vmatmul.mubr.f32.gmra.mrb[0].mxu0 %v354
    %v493 = vpop.f32.mrb[0].mxu0
    %v494 = vadd.f32 0.0, %v493
    %v495 = vpop.f32.mrb[0].mxu0
    %496 = vmatprep.mubr.f32.mxu0 0.0
    %497 = vmatmul.mubr.f32.gmra.mrb[0].mxu0 %v357
    %v498 = vpop.f32.mrb[0].mxu0
    %v499 = vadd.f32 0.0, %v498
    %v500 = vpop.f32.mrb[0].mxu0
    %501 = vmatprep.mubr.f32.mxu0 0.0
    %502 = vmatmul.mubr.f32.gmra.mrb[0].mxu0 %v360
    %v503 = vpop.f32.mrb[0].mxu0
    %v504 = vadd.f32 0.0, %v503
    %v505 = vpop.f32.mrb[0].mxu0
    %506 = vdwg.mxu0
    %v507 = vrcp.pop %v268
    %v508 = vmul.f32 1.0, %v507
    %v509 = vrcp.pop %v271
    %v510 = vmul.f32 1.0, %v509
    %v511 = vrcp.pop %v274
    %v512 = vmul.f32 1.0, %v511
    %v513 = vrcp.pop %v277
    %v514 = vmul.f32 1.0, %v513
    %v515 = vrcp.pop %v280
    %v516 = vmul.f32 1.0, %v515
    %v517 = vrcp.pop %v283
    %v518 = vmul.f32 1.0, %v517
    %v519 = vrcp.pop %v286
    %v520 = vmul.f32 1.0, %v519
    %v521 = vrcp.pop %v289
    %v522 = vmul.f32 1.0, %v521
    %v523 = vrcp.pop %v292
    %v524 = vmul.f32 1.0, %v523
    %v525 = vrcp.pop %v295
    %v526 = vmul.f32 1.0, %v525
    %v527 = vrcp.pop %v298
    %v528 = vmul.f32 1.0, %v527
    %v529 = vrcp.pop %v301
    %v530 = vmul.f32 1.0, %v529
    %v531 = vrcp.pop %v304
    %v532 = vmul.f32 1.0, %v531
    %v533 = vrcp.pop %v307
    %v534 = vmul.f32 1.0, %v533
    %v535 = vrcp.pop %v310
    %v536 = vmul.f32 1.0, %v535
    %v537 = vrcp.pop %v313
    %v538 = vmul.f32 1.0, %v537
    %v539 = vmul.f32 %v429, %v508
    %v540 = vmul.f32 %v434, %v510
    %v541 = vmul.f32 %v439, %v512
    %v542 = vmul.f32 %v444, %v514
    %v543 = vmul.f32 %v449, %v516
    %v544 = vmul.f32 %v454, %v518
    %v545 = vmul.f32 %v459, %v520
    %v546 = vmul.f32 %v464, %v522
    %v547 = vmul.f32 %v469, %v524
    %v548 = vmul.f32 %v474, %v526
    %v549 = vmul.f32 %v479, %v528
    %v550 = vmul.f32 %v484, %v530
    %v551 = vmul.f32 %v489, %v532
    %v552 = vmul.f32 %v494, %v534
    %v553 = vmul.f32 %v499, %v536
    %v554 = vmul.f32 %v504, %v538
    %555 = vxpose.xlu0.b32.start [1/16] %v539, 128
    %556 = vxpose.xlu0.b32.cont [2/16] %v540, 128
    %557 = vxpose.xlu0.b32.cont [3/16] %v541, 128
    %558 = vxpose.xlu0.b32.cont [4/16] %v542, 128
    %559 = vxpose.xlu0.b32.cont [5/16] %v543, 128
    %560 = vxpose.xlu0.b32.cont [6/16] %v544, 128
    %561 = vxpose.xlu0.b32.cont [7/16] %v545, 128
    %562 = vxpose.xlu0.b32.cont [8/16] %v546, 128
    %563 = vxpose.xlu0.b32.cont [9/16] %v547, 128
    %564 = vxpose.xlu0.b32.cont [10/16] %v548, 128
    %565 = vxpose.xlu0.b32.cont [11/16] %v549, 128
    %566 = vxpose.xlu0.b32.cont [12/16] %v550, 128
    %567 = vxpose.xlu0.b32.cont [13/16] %v551, 128
    %568 = vxpose.xlu0.b32.cont [14/16] %v552, 128
    %569 = vxpose.xlu0.b32.cont [15/16] %v553, 128
    %570 = vxpose.xlu0.b32.end [16/16] %v554, 128
    %v571 = vpop.trf.xlu0
    %v572 = vpop.trf.xlu0
    %v573 = vpop.trf.xlu0
    %v574 = vpop.trf.xlu0
    %v575 = vpop.trf.xlu0
    %v576 = vpop.trf.xlu0
    %v577 = vpop.trf.xlu0
    %v578 = vpop.trf.xlu0
    %v579 = vpop.trf.xlu0
    %v580 = vpop.trf.xlu0
    %v581 = vpop.trf.xlu0
    %v582 = vpop.trf.xlu0
    %v583 = vpop.trf.xlu0
    %v584 = vpop.trf.xlu0
    %v585 = vpop.trf.xlu0
    %v586 = vpop.trf.xlu0
    %v587 = vmul.f32 %v246, %v246
    %588 = vadd.xlane.f32.xlu0 %v587
    %v589 = vpop.xlane.xlu0 %588
    %v590 = vmul.f32 %v571, %v571
    %v591 = vmul.f32 %v572, %v572
    %v592 = vmul.f32 %v573, %v573
    %v593 = vmul.f32 %v574, %v574
    %v594 = vmul.f32 %v575, %v575
    %v595 = vmul.f32 %v576, %v576
    %v596 = vmul.f32 %v577, %v577
    %v597 = vmul.f32 %v578, %v578
    %v598 = vmul.f32 %v579, %v579
    %v599 = vmul.f32 %v580, %v580
    %v600 = vmul.f32 %v581, %v581
    %v601 = vmul.f32 %v582, %v582
    %v602 = vmul.f32 %v583, %v583
    %v603 = vmul.f32 %v584, %v584
    %v604 = vmul.f32 %v585, %v585
    %v605 = vmul.f32 %v586, %v586
    %v606 = vadd.f32 %v590, %v591
    %v607 = vadd.f32 %v606, %v592
    %v608 = vadd.f32 %v607, %v593
    %v609 = vadd.f32 %v608, %v594
    %v610 = vadd.f32 %v609, %v595
    %v611 = vadd.f32 %v610, %v596
    %v612 = vadd.f32 %v611, %v597
    %v613 = vadd.f32 %v612, %v598
    %v614 = vadd.f32 %v613, %v599
    %v615 = vadd.f32 %v614, %v600
    %v616 = vadd.f32 %v615, %v601
    %v617 = vadd.f32 %v616, %v602
    %v618 = vadd.f32 %v617, %v603
    %v619 = vadd.f32 %v618, %v604
    %v620 = vadd.f32 %v619, %v605
    %v621 = vrot.slane %v620, 4
    %v622 = vadd.f32 %v620, %v621
    %v623 = vrot.slane %v622, 2
    %v624 = vadd.f32 %v622, %v623
    %v625 = vrot.slane %v624, 1
    %v626 = vadd.f32 %v624, %v625
    %627 = vmatprep.subr.mxu0 0.0
    %628 = vmatpush1.msra.mxu0 %v571
    %629 = vmatprep.subr.mxu0 0.0
    %630 = vmatpush1.msra.mxu0 %v572
    %631 = vmatprep.subr.mxu0 0.0
    %632 = vmatpush1.msra.mxu0 %v573
    %633 = vmatprep.subr.mxu0 0.0
    %634 = vmatpush1.msra.mxu0 %v574
    %635 = vmatprep.subr.mxu0 0.0
    %636 = vmatpush1.msra.mxu0 %v575
    %637 = vmatprep.subr.mxu0 0.0
    %638 = vmatpush1.msra.mxu0 %v576
    %639 = vmatprep.subr.mxu0 0.0
    %640 = vmatpush1.msra.mxu0 %v577
    %641 = vmatprep.subr.mxu0 0.0
    %642 = vmatpush1.msra.mxu0 %v578
    %643 = vmatprep.subr.mxu0 0.0
    %644 = vmatpush1.msra.mxu0 %v579
    %645 = vmatprep.subr.mxu0 0.0
    %646 = vmatpush1.msra.mxu0 %v580
    %647 = vmatprep.subr.mxu0 0.0
    %648 = vmatpush1.msra.mxu0 %v581
    %649 = vmatprep.subr.mxu0 0.0
    %650 = vmatpush1.msra.mxu0 %v582
    %651 = vmatprep.subr.mxu0 0.0
    %652 = vmatpush1.msra.mxu0 %v583
    %653 = vmatprep.subr.mxu0 0.0
    %654 = vmatpush1.msra.mxu0 %v584
    %655 = vmatprep.subr.mxu0 0.0
    %656 = vmatpush1.msra.mxu0 %v585
    %657 = vmatprep.subr.mxu0 0.0
    %658 = vmatpush1.msra.mxu0 %v586
    %659 = vmatprep.subr.mxu0 0.0
    %660 = vmatpush1.msra.mxu0 0.0
    %661 = vmatprep.subr.mxu0 0.0
    %662 = vmatpush1.msra.mxu0 0.0
    %663 = vmatprep.subr.mxu0 0.0
    %664 = vmatpush1.msra.mxu0 0.0
    %665 = vmatprep.subr.mxu0 0.0
    %666 = vmatpush1.msra.mxu0 0.0
    %667 = vmatprep.subr.mxu0 0.0
    %668 = vmatpush1.msra.mxu0 0.0
    %669 = vmatprep.subr.mxu0 0.0
    %670 = vmatpush1.msra.mxu0 0.0
    %671 = vmatprep.subr.mxu0 0.0
    %672 = vmatpush1.msra.mxu0 0.0
    %673 = vmatprep.subr.mxu0 0.0
    %674 = vmatpush1.msra.mxu0 0.0
    %675 = vmatprep.subr.mxu0 0.0
    %676 = vmatpush1.msra.mxu0 0.0
    %677 = vmatprep.subr.mxu0 0.0
    %678 = vmatpush1.msra.mxu0 0.0
    %679 = vmatprep.subr.mxu0 0.0
    %680 = vmatpush1.msra.mxu0 0.0
    %681 = vmatprep.subr.mxu0 0.0
    %682 = vmatpush1.msra.mxu0 0.0
    %683 = vmatprep.subr.mxu0 0.0
    %684 = vmatpush1.msra.mxu0 0.0
    %685 = vmatprep.subr.mxu0 0.0
    %686 = vmatpush1.msra.mxu0 0.0
    %687 = vmatprep.subr.mxu0 0.0
    %688 = vmatpush1.msra.mxu0 0.0
    %689 = vmatprep.subr.mxu0 0.0
    %690 = vmatpush1.msra.mxu0 0.0
    %691 = vmatprep.mubr.f32.mxu0 0.0
    %692 = vmatmul.mubr.f32.gmra.mrb[0].mxu0 %v246
    %v693 = vpop.f32.mrb[0].mxu0
    %v694 = vadd.f32 0.0, %v693
    %v695 = vpop.f32.mrb[0].mxu0
    %696 = vdwg.mxu0
    %v697 = vadd.f32 %v589, %v626
    %v698 = vmul.f32 %v694, 2.0
    %v699 = vsub.f32 %v697, %v698
    %v700 = vmax.f32 %v699, 0.0
    %v701 = vrsqrt.pop %v700
    %v702 = vmul.f32 %v700, %v701
    %vm703 = vcmp.eq.f32.partialorder %v700, inf
    %v704 = vsel %vm703, %v700, %v702
    %vm705 = vcmp.eq.f32.partialorder %v700, 0.0
    %v706 = vand.u32 %v700, 2147483648
    %v707 = vsel %vm705, %v706, %v704
    %708 = vst [vmem:[%s6] sm:$0xff] %v707
    // Predicated region
    $region30: #{_forward_impl.1} parent=1 // pred_check
      _
    $region31: #{_forward_impl.1} parent=1 // pred_check_branch
      %710 = sbr.rel (0) target = $region33
    $region32: #{_forward_impl.1} parent=1 // pred_region
      _
    $region33: #{_forward_impl.1} parent=1 // pred_fallthru
      _
    // Predicated region
    $region34: #{_forward_impl.1} parent=1 // pred_check
      _
    $region35: #{_forward_impl.1} parent=1 // pred_check_branch
      %712 = sbr.rel (0) target = $region37
    $region36: #{_forward_impl.1} parent=1 // pred_region
      _
    $region37: #{_forward_impl.1} parent=1 // pred_fallthru
      _
    %713 = vsyncpa [#allocation3], 1

</llo_original>
